<compile_context>
chip_gen: v7x
topology: tpu7x:2x2x1
jax: 0.10.0
libtpu: 0.0.40
codegen_flags: <defaults>
</compile_context>

<pallas_src>
import jax
import jax.numpy as jnp
from jax.experimental import pallas as pl
from jax.experimental.pallas import tpu as pltpu


def _round_up(x, m):
    return (x + m - 1) // m * m


def _leaky_relu(h):
    # negative_slope = 0.01 (PyTorch nn.LeakyReLU default); one vmax per elem.
    return jnp.maximum(h, 0.01 * h)


def _vmem_capacity_bytes():
    # Hardware-aware VMEM cap: 128 MiB on v5e/v6e, 64 MiB on v7x.
    try:
        return int(pltpu.get_tpu_info().vmem_capacity_bytes)
    except Exception:
        return 64 * 1024 * 1024  # conservative (v7x-sized) fallback


# ----------------------------------------------------------------------------
# Kernels
# ----------------------------------------------------------------------------

def mlp_resident_kernel(x_ref, w1_ref, b1_ref, w2_ref, b2_ref, w3_ref, b3_ref,
                        o_ref):
    """All three weight matrices resident in VMEM; grid is batch-only."""
    cdt = w1_ref.dtype  # compute dtype (bf16); MXU accumulation is f32
    h1 = jnp.dot(x_ref[...], w1_ref[...], preferred_element_type=jnp.float32)
    h1 = _leaky_relu(h1 + b1_ref[...]).astype(cdt)
    # TODO(synk): training-mode Dropout(p>0) would use pltpu.prng_seed +
    # pltpu.stateful_bernoulli here; forward() spec has p=0 / eval => identity.
    h2 = jnp.dot(h1, w2_ref[...], preferred_element_type=jnp.float32)
    h2 = _leaky_relu(h2 + b2_ref[...]).astype(cdt)
    h3 = jnp.dot(h2, w3_ref[...], preferred_element_type=jnp.float32)
    o_ref[...] = jnp.tanh(h3 + b3_ref[...]).astype(o_ref.dtype)


def mlp_hf_tiled_kernel(x_ref, w1_ref, b1_ref, w2_ref, b2_ref, w3_ref, b3_ref,
                        o_ref, h1_sc, acc_sc):
    """Layers 2/3 tiled along hidden*factor (grid axis 1, 'arbitrary').

    Layer-1 activation is computed once per batch tile (j==0) into a VMEM
    scratch; layer-3 partial products accumulate in an f32 VMEM accumulator.
    """
    cdt = w1_ref.dtype
    j = pl.program_id(1)

    @pl.when(j == 0)
    def _():
        h1 = jnp.dot(x_ref[...], w1_ref[...],
                     preferred_element_type=jnp.float32)
        h1_sc[...] = _leaky_relu(h1 + b1_ref[...]).astype(h1_sc.dtype)
        acc_sc[...] = jnp.zeros_like(acc_sc)

    h2 = jnp.dot(h1_sc[...], w2_ref[...], preferred_element_type=jnp.float32)
    h2 = _leaky_relu(h2 + b2_ref[...]).astype(cdt)
    acc_sc[...] += jnp.dot(h2, w3_ref[...], preferred_element_type=jnp.float32)

    @pl.when(j == pl.num_programs(1) - 1)
    def _():
        o_ref[...] = jnp.tanh(acc_sc[...] + b3_ref[...]).astype(o_ref.dtype)


# ----------------------------------------------------------------------------
# Sizing heuristics
# ----------------------------------------------------------------------------

def _pick_bm(B):
    """Batch tile: big for MXU occupancy, bm % 16 == 0 (bf16 row packing),
    and >=4 grid steps for large B so each v7x TensorCore pipelines >=2 steps
    (x-load / out-store hidden behind the neighbouring step's MXU work)."""
    if B < 16:
        return 8
    if B < 256:
        return min(512, _round_up(pl.cdiv(B, 2), 16))
    return min(512, _round_up(pl.cdiv(B, 4), 16))


def _pick_hf_block(hf_p):
    for cand in (512, 384, 256, 128):
        if hf_p % cand == 0:
            return cand
    return 128


def _vmem_limit_resident(bm, in_p, h_p, hf_p, out_p, cdt_size, out_size,
                         weight_buffers, vmem_cap):
    # Budget once, accurately (no extra 2x hedge). Weights/biases use
    # `weight_buffers` buffers (1 when single-buffered); IO tiles use 2.
    w_bytes = (in_p * h_p + h_p * hf_p + hf_p * out_p) * cdt_size
    bias_bytes = (h_p + hf_p + out_p) * 4
    io_bytes = bm * in_p * cdt_size + bm * out_p * out_size
    inter_bytes = bm * (h_p + hf_p + out_p) * 4      # f32 temporaries in body
    need = (weight_buffers * (w_bytes + bias_bytes) + 2 * io_bytes
            + inter_bytes + 4 * 1024 * 1024)          # compiler-scratch headroom
    return int(min(max(need, 16 * 1024 * 1024), int(0.85 * vmem_cap)))


def _vmem_limit_tiled(bm, in_p, h_p, hf_blk, out_p, cdt_size, out_size,
                      weight_buffers, vmem_cap):
    const_bytes = in_p * h_p * cdt_size + (h_p + out_p) * 4        # w1, b1, b3
    tile_bytes = (h_p * hf_blk + hf_blk * out_p) * cdt_size + hf_blk * 4
    io_bytes = bm * in_p * cdt_size + bm * out_p * out_size
    scratch_bytes = bm * h_p * cdt_size + bm * out_p * 4
    inter_bytes = bm * (h_p + hf_blk + out_p) * 4
    need = (weight_buffers * const_bytes + 2 * tile_bytes + 2 * io_bytes
            + scratch_bytes + inter_bytes + 4 * 1024 * 1024)
    return int(min(max(need, 16 * 1024 * 1024), int(0.85 * vmem_cap)))


# ----------------------------------------------------------------------------
# Wrapper
# ----------------------------------------------------------------------------

def prepare_params(params, *, compute_dtype=jnp.bfloat16):
    """One-time weight padding + cast (do this once, not per forward call).

    Zero padding of feature dims is mathematically exact: padded rows/cols
    contribute 0 to the matmuls, LeakyReLU(0)=0, tanh(0)=0.  Note that true
    dims in (128, 256] already round to 256, matching v6e/v7x's 256x256 MXU.
    """
    w1, b1 = params["w1"], params["b1"]
    w2, b2 = params["w2"], params["b2"]
    w3, b3 = params["w3"], params["b3"]
    in_f, h = w1.shape
    hf = w2.shape[1]
    out_f = w3.shape[1]
    in_p, h_p = _round_up(in_f, 128), _round_up(h, 128)
    hf_p, out_p = _round_up(hf, 128), _round_up(out_f, 128)

    def pad2(a, r, c, dt):
        return jnp.pad(a, ((0, r - a.shape[0]), (0, c - a.shape[1]))).astype(dt)

    return {
        "w1": pad2(w1, in_p, h_p, compute_dtype),
        "b1": pad2(b1, 1, h_p, jnp.float32),
        "w2": pad2(w2, h_p, hf_p, compute_dtype),
        "b2": pad2(b2, 1, hf_p, jnp.float32),
        "w3": pad2(w3, hf_p, out_p, compute_dtype),
        "b3": pad2(b3, 1, out_p, jnp.float32),
        "dims": (in_f, h, hf, out_f),
        "padded_dims": (in_p, h_p, hf_p, out_p),
        "compute_dtype": compute_dtype,
    }


def network_forward(x, params, *, bm=None, out_dtype=None, hf_block=None,
                    return_padded=False):
    """Fused Network.forward as a single Pallas kernel.

    x:      [B, in_features] float32
    params: raw dict (w1 [in,h], b1 [1,h], w2 [h,hf], b2 [1,hf], w3 [hf,out],
            b3 [1,out]) or — preferably — the output of prepare_params().
    """
    if "dims" not in params:
        params = prepare_params(params)
    in_f, h, hf, out_f = params["dims"]
    in_p, h_p, hf_p, out_p = params["padded_dims"]
    cdt = params["compute_dtype"]
    w1p, b1p = params["w1"], params["b1"]
    w2p, b2p = params["w2"], params["b2"]
    w3p, b3p = params["w3"], params["b3"]

    B = x.shape[0]
    assert x.shape[1] == in_f
    if out_dtype is None:
        out_dtype = x.dtype

    xp = x if in_p == in_f else jnp.pad(x, ((0, 0), (0, in_p - in_f)))
    xp = xp.astype(cdt)

    if bm is None:
        bm = _pick_bm(B)
    n_b = pl.cdiv(B, bm)

    cdt_size = jnp.dtype(cdt).itemsize
    out_size = jnp.dtype(out_dtype).itemsize
    vmem_cap = _vmem_capacity_bytes()

    w_resident_bytes = (in_p * h_p + h_p * hf_p + hf_p * out_p) * cdt_size
    use_tiled = (hf_block is not None) or (w_resident_bytes > int(0.35 * vmem_cap))

    cost = pl.CostEstimate(
        flops=2 * B * (in_p * h_p + h_p * hf_p + hf_p * out_p),
        transcendentals=B * out_p,
        bytes_accessed=(B * in_p * cdt_size + w_resident_bytes
                        + (h_p + hf_p + out_p) * 4 + B * out_p * out_size),
    )

    args = (xp, w1p, b1p, w2p, b2p, w3p, b3p)

    if not use_tiled:
        def build(wbuf):
            const = {} if wbuf == 2 else dict(pipeline_mode=pl.Buffered(wbuf))
            vmem_limit = _vmem_limit_resident(bm, in_p, h_p, hf_p, out_p,
                                              cdt_size, out_size, wbuf, vmem_cap)
            return pl.pallas_call(
                mlp_resident_kernel,
                out_shape=jax.ShapeDtypeStruct((B, out_p), out_dtype),
                grid_spec=pltpu.PrefetchScalarGridSpec(
                    num_scalar_prefetch=0,
                    grid=(n_b,),
                    in_specs=[
                        pl.BlockSpec((bm, in_p), lambda i: (i, 0)),
                        pl.BlockSpec((in_p, h_p), lambda i: (0, 0), **const),
                        pl.BlockSpec((1, h_p), lambda i: (0, 0), **const),
                        pl.BlockSpec((h_p, hf_p), lambda i: (0, 0), **const),
                        pl.BlockSpec((1, hf_p), lambda i: (0, 0), **const),
                        pl.BlockSpec((hf_p, out_p), lambda i: (0, 0), **const),
                        pl.BlockSpec((1, out_p), lambda i: (0, 0), **const),
                    ],
                    out_specs=pl.BlockSpec((bm, out_p), lambda i: (i, 0)),
                ),
                compiler_params=pltpu.CompilerParams(
                    dimension_semantics=("parallel",),
                    vmem_limit_bytes=vmem_limit),
                cost_estimate=cost,
            )
    else:
        if hf_block is None:
            hf_block = _pick_hf_block(hf_p)
        assert hf_p % hf_block == 0, "hf_block must divide padded hidden*factor"
        n_hf = hf_p // hf_block

        def build(wbuf):
            const = {} if wbuf == 2 else dict(pipeline_mode=pl.Buffered(wbuf))
            vmem_limit = _vmem_limit_tiled(bm, in_p, h_p, hf_block, out_p,
                                           cdt_size, out_size, wbuf, vmem_cap)
            return pl.pallas_call(
                mlp_hf_tiled_kernel,
                out_shape=jax.ShapeDtypeStruct((B, out_p), out_dtype),
                grid_spec=pltpu.PrefetchScalarGridSpec(
                    num_scalar_prefetch=0,
                    grid=(n_b, n_hf),
                    in_specs=[
                        pl.BlockSpec((bm, in_p), lambda i, j: (i, 0)),
                        pl.BlockSpec((in_p, h_p), lambda i, j: (0, 0), **const),
                        pl.BlockSpec((1, h_p), lambda i, j: (0, 0), **const),
                        pl.BlockSpec((h_p, hf_block), lambda i, j: (0, j)),
                        pl.BlockSpec((1, hf_block), lambda i, j: (0, j)),
                        pl.BlockSpec((hf_block, out_p), lambda i, j: (j, 0)),
                        pl.BlockSpec((1, out_p), lambda i, j: (0, 0), **const),
                    ],
                    out_specs=pl.BlockSpec((bm, out_p), lambda i, j: (i, 0)),
                    scratch_shapes=[pltpu.VMEM((bm, h_p), cdt),
                                    pltpu.VMEM((bm, out_p), jnp.float32)],
                ),
                compiler_params=pltpu.CompilerParams(
                    dimension_semantics=("parallel", "arbitrary"),
                    vmem_limit_bytes=vmem_limit),
                cost_estimate=cost,
            )

    try:
        out_padded = jax.block_until_ready(build(1)(*args))
    except Exception:
        # TODO(synk): drop this fallback once pl.Buffered(1) on constant-index
        # BlockSpecs is confirmed supported on the target jax/libtpu version.
        out_padded = build(2)(*args)

    if return_padded or out_p == out_f:
        return out_padded
    return out_padded[:, :out_f]


# ----------------------------------------------------------------------------
# Test harness
# ----------------------------------------------------------------------------

def init_params(key, in_features, hidden, out_features, factor=1):
    """Deterministic synthetic parameter init (Kaiming-uniform-ish)."""
    k1, k2, k3, k4, k5, k6 = jax.random.split(key, 6)
    hf = hidden * factor

    def lin_init(kw, kb, fan_in, fan_out):
        bound = 1.0 / jnp.sqrt(fan_in)
        w = jax.random.uniform(kw, (fan_in, fan_out), jnp.float32, -bound, bound)
        b = jax.random.uniform(kb, (1, fan_out), jnp.float32, -bound, bound)
        return w, b

    w1, b1 = lin_init(k1, k2, in_features, hidden)
    w2, b2 = lin_init(k3, k4, hidden, hf)
    w3, b3 = lin_init(k5, k6, hf, out_features)
    return {"w1": w1, "b1": b1, "w2": w2, "b2": b2, "w3": w3, "b3": b3}


def reference_forward(x, p, compute_dtype=jnp.bfloat16):
    """Reference mirroring the kernel numerics: bf16 operands, f32 accumulate."""
    def q(a):
        return a.astype(compute_dtype).astype(jnp.float32)

    h1 = q(x) @ q(p["w1"]) + p["b1"]
    h1 = q(jnp.maximum(h1, 0.01 * h1))
    h2 = h1 @ q(p["w2"]) + p["b2"]
    h2 = q(jnp.maximum(h2, 0.01 * h2))
    h3 = h2 @ q(p["w3"]) + p["b3"]
    return jnp.tanh(h3)


if __name__ == "__main__":
    key = jax.random.PRNGKey(0)
    kx1, kp1, kx2, kp2 = jax.random.split(key, 4)

    # --- Test 1: small model, resident-weight path, weights prepared once. ---
    B1, in1, hid1, out1, fac1 = 8, 32, 32, 16, 1
    x1 = jax.random.normal(kx1, (B1, in1), jnp.float32)
    params1 = init_params(kp1, in1, hid1, out1, fac1)
    prepped1 = prepare_params(params1)

    out1_k = jax.block_until_ready(network_forward(x1, prepped1))
    ref1 = reference_forward(x1, params1)
    assert out1_k.shape == (B1, out1)
    assert jnp.allclose(out1_k, ref1, atol=2e-3, rtol=2e-3), "resident path mismatch"

    # --- Test 2: non-divisible batch + forced hf-tiled (K/N) path. ---
    B2, in2, hid2, out2, fac2 = 20, 64, 64, 16, 4   # hidden*factor = 256
    x2 = jax.random.normal(kx2, (B2, in2), jnp.float32)
    params2 = init_params(kp2, in2, hid2, out2, fac2)

    out2_k = jax.block_until_ready(
        network_forward(x2, params2, bm=16, hf_block=128))
    ref2 = reference_forward(x2, params2)
    assert out2_k.shape == (B2, out2)
    assert jnp.allclose(out2_k, ref2, atol=2e-3, rtol=2e-3), "tiled path mismatch"

    print("KERNEL_OK")
</pallas_src>

<mosaic_0001>
module attributes {stable_mosaic.version = 11 : i64} {
  func.func @mlp_resident_kernel(%arg0: i32, %arg1: memref<8x128xbf16, #tpu.memory_space<vmem>>, %arg2: memref<128x128xbf16, #tpu.memory_space<vmem>>, %arg3: memref<1x128xf32, #tpu.memory_space<vmem>>, %arg4: memref<128x128xbf16, #tpu.memory_space<vmem>>, %arg5: memref<1x128xf32, #tpu.memory_space<vmem>>, %arg6: memref<128x128xbf16, #tpu.memory_space<vmem>>, %arg7: memref<1x128xf32, #tpu.memory_space<vmem>>, %arg8: memref<8x128xf32, #tpu.memory_space<vmem>>) attributes {dimension_semantics = [#tpu.dimension_semantics<parallel>], iteration_bounds = array<i64: 1>, scalar_prefetch = 0 : i64, scratch_operands = 0 : i64, tpu.core_type = #tpu.core_type<tc>, window_params = [{transform_indices = @transform_0, window_bounds = array<i64: 8, 128>}, {pipeline_mode = #tpu.pipeline_mode<synchronous>, transform_indices = @transform_1, window_bounds = array<i64: 128, 128>}, {pipeline_mode = #tpu.pipeline_mode<synchronous>, transform_indices = @transform_2, window_bounds = array<i64: 1, 128>}, {pipeline_mode = #tpu.pipeline_mode<synchronous>, transform_indices = @transform_3, window_bounds = array<i64: 128, 128>}, {pipeline_mode = #tpu.pipeline_mode<synchronous>, transform_indices = @transform_4, window_bounds = array<i64: 1, 128>}, {pipeline_mode = #tpu.pipeline_mode<synchronous>, transform_indices = @transform_5, window_bounds = array<i64: 128, 128>}, {pipeline_mode = #tpu.pipeline_mode<synchronous>, transform_indices = @transform_6, window_bounds = array<i64: 1, 128>}, {transform_indices = @transform_7, window_bounds = array<i64: 8, 128>}]} {
    %c0 = arith.constant 0 : index
    %c0_0 = arith.constant 0 : index
    %0 = vector.load %arg1[%c0, %c0_0] : memref<8x128xbf16, #tpu.memory_space<vmem>>, vector<8x128xbf16>
    %c0_1 = arith.constant 0 : index
    %c0_2 = arith.constant 0 : index
    %1 = vector.load %arg2[%c0_1, %c0_2] : memref<128x128xbf16, #tpu.memory_space<vmem>>, vector<128x128xbf16>
    %cst = arith.constant dense<0.000000e+00> : vector<8x128xf32>
    %2 = tpu.matmul %0, %1, %cst {dimension_numbers = #tpu.dot_dimension_numbers<[1], [0], [0], [1], [0, 0, 1, 1], [], []>} : vector<8x128xbf16>, vector<128x128xbf16>, vector<8x128xf32> -> vector<8x128xf32>
    %c0_3 = arith.constant 0 : index
    %c0_4 = arith.constant 0 : index
    %3 = vector.load %arg3[%c0_3, %c0_4] : memref<1x128xf32, #tpu.memory_space<vmem>>, vector<1x128xf32>
    %4 = vector.broadcast %3 : vector<1x128xf32> to vector<8x128xf32>
    %5 = arith.addf %2, %4 : vector<8x128xf32>
    %cst_5 = arith.constant 0.00999999977 : f32
    %6 = vector.broadcast %cst_5 : f32 to vector<8x128xf32>
    %7 = arith.mulf %6, %5 : vector<8x128xf32>
    %8 = arith.maximumf %5, %7 : vector<8x128xf32>
    %9 = arith.truncf %8 : vector<8x128xf32> to vector<8x128xbf16>
    %c0_6 = arith.constant 0 : index
    %c0_7 = arith.constant 0 : index
    %10 = vector.load %arg4[%c0_6, %c0_7] : memref<128x128xbf16, #tpu.memory_space<vmem>>, vector<128x128xbf16>
    %cst_8 = arith.constant dense<0.000000e+00> : vector<8x128xf32>
    %11 = tpu.matmul %9, %10, %cst_8 {dimension_numbers = #tpu.dot_dimension_numbers<[1], [0], [0], [1], [0, 0, 1, 1], [], []>} : vector<8x128xbf16>, vector<128x128xbf16>, vector<8x128xf32> -> vector<8x128xf32>
    %c0_9 = arith.constant 0 : index
    %c0_10 = arith.constant 0 : index
    %12 = vector.load %arg5[%c0_9, %c0_10] : memref<1x128xf32, #tpu.memory_space<vmem>>, vector<1x128xf32>
    %13 = vector.broadcast %12 : vector<1x128xf32> to vector<8x128xf32>
    %14 = arith.addf %11, %13 : vector<8x128xf32>
    %cst_11 = arith.constant 0.00999999977 : f32
    %15 = vector.broadcast %cst_11 : f32 to vector<8x128xf32>
    %16 = arith.mulf %15, %14 : vector<8x128xf32>
    %17 = arith.maximumf %14, %16 : vector<8x128xf32>
    %18 = arith.truncf %17 : vector<8x128xf32> to vector<8x128xbf16>
    %c0_12 = arith.constant 0 : index
    %c0_13 = arith.constant 0 : index
    %19 = vector.load %arg6[%c0_12, %c0_13] : memref<128x128xbf16, #tpu.memory_space<vmem>>, vector<128x128xbf16>
    %cst_14 = arith.constant dense<0.000000e+00> : vector<8x128xf32>
    %20 = tpu.matmul %18, %19, %cst_14 {dimension_numbers = #tpu.dot_dimension_numbers<[1], [0], [0], [1], [0, 0, 1, 1], [], []>} : vector<8x128xbf16>, vector<128x128xbf16>, vector<8x128xf32> -> vector<8x128xf32>
    %c0_15 = arith.constant 0 : index
    %c0_16 = arith.constant 0 : index
    %21 = vector.load %arg7[%c0_15, %c0_16] : memref<1x128xf32, #tpu.memory_space<vmem>>, vector<1x128xf32>
    %22 = vector.broadcast %21 : vector<1x128xf32> to vector<8x128xf32>
    %23 = arith.addf %20, %22 : vector<8x128xf32>
    %24 = math.tanh %23 : vector<8x128xf32>
    %c0_17 = arith.constant 0 : index
    %c0_18 = arith.constant 0 : index
    %25 = vector.load %arg8[%c0_17, %c0_18] : memref<8x128xf32, #tpu.memory_space<vmem>>, vector<8x128xf32>
    tpu.vector_store %arg8[%c0_17, %c0_18], %24 {strides = array<i32>} : memref<8x128xf32, #tpu.memory_space<vmem>>, vector<8x128xf32>,
    return
  }
  func.func @transform_0(%arg0: i32) -> (i32, i32) {
    %c0_i32 = arith.constant 0 : i32
    %c0_i32_0 = arith.constant 0 : i32
    return %arg0, %c0_i32 : i32, i32
  }
  func.func @transform_1(%arg0: i32) -> (i32, i32) {
    %c0_i32 = arith.constant 0 : i32
    %c0_i32_0 = arith.constant 0 : i32
    %c0_i32_1 = arith.constant 0 : i32
    return %c0_i32, %c0_i32_0 : i32, i32
  }
  func.func @transform_2(%arg0: i32) -> (i32, i32) {
    %c0_i32 = arith.constant 0 : i32
    %c0_i32_0 = arith.constant 0 : i32
    %c0_i32_1 = arith.constant 0 : i32
    return %c0_i32, %c0_i32_0 : i32, i32
  }
  func.func @transform_3(%arg0: i32) -> (i32, i32) {
    %c0_i32 = arith.constant 0 : i32
    %c0_i32_0 = arith.constant 0 : i32
    %c0_i32_1 = arith.constant 0 : i32
    return %c0_i32, %c0_i32_0 : i32, i32
  }
  func.func @transform_4(%arg0: i32) -> (i32, i32) {
    %c0_i32 = arith.constant 0 : i32
    %c0_i32_0 = arith.constant 0 : i32
    %c0_i32_1 = arith.constant 0 : i32
    return %c0_i32, %c0_i32_0 : i32, i32
  }
  func.func @transform_5(%arg0: i32) -> (i32, i32) {
    %c0_i32 = arith.constant 0 : i32
    %c0_i32_0 = arith.constant 0 : i32
    %c0_i32_1 = arith.constant 0 : i32
    return %c0_i32, %c0_i32_0 : i32, i32
  }
  func.func @transform_6(%arg0: i32) -> (i32, i32) {
    %c0_i32 = arith.constant 0 : i32
    %c0_i32_0 = arith.constant 0 : i32
    %c0_i32_1 = arith.constant 0 : i32
    return %c0_i32, %c0_i32_0 : i32, i32
  }
  func.func @transform_7(%arg0: i32) -> (i32, i32) {
    %c0_i32 = arith.constant 0 : i32
    %c0_i32_0 = arith.constant 0 : i32
    return %arg0, %c0_i32 : i32, i32
  }
}

module attributes {stable_mosaic.version = 11 : i64} {
  func.func @mlp_resident_kernel(%arg0: i32, %arg1: memref<8x128xbf16, #tpu.memory_space<vmem>>, %arg2: memref<128x128xbf16, #tpu.memory_space<vmem>>, %arg3: memref<1x128xf32, #tpu.memory_space<vmem>>, %arg4: memref<128x128xbf16, #tpu.memory_space<vmem>>, %arg5: memref<1x128xf32, #tpu.memory_space<vmem>>, %arg6: memref<128x128xbf16, #tpu.memory_space<vmem>>, %arg7: memref<1x128xf32, #tpu.memory_space<vmem>>, %arg8: memref<8x128xf32, #tpu.memory_space<vmem>>) attributes {dimension_semantics = [#tpu.dimension_semantics<parallel>], iteration_bounds = array<i64: 1>, scalar_prefetch = 0 : i64, scratch_operands = 0 : i64, tpu.core_type = #tpu.core_type<tc>, window_params = [{transform_indices = @transform_0, window_bounds = array<i64: 8, 128>}, {pipeline_mode = #tpu.pipeline_mode<synchronous>, transform_indices = @transform_1, window_bounds = array<i64: 128, 128>}, {pipeline_mode = #tpu.pipeline_mode<synchronous>, transform_indices = @transform_2, window_bounds = array<i64: 1, 128>}, {pipeline_mode = #tpu.pipeline_mode<synchronous>, transform_indices = @transform_3, window_bounds = array<i64: 128, 128>}, {pipeline_mode = #tpu.pipeline_mode<synchronous>, transform_indices = @transform_4, window_bounds = array<i64: 1, 128>}, {pipeline_mode = #tpu.pipeline_mode<synchronous>, transform_indices = @transform_5, window_bounds = array<i64: 128, 128>}, {pipeline_mode = #tpu.pipeline_mode<synchronous>, transform_indices = @transform_6, window_bounds = array<i64: 1, 128>}, {transform_indices = @transform_7, window_bounds = array<i64: 8, 128>}]} {
    %c0 = arith.constant 0 : index
    %c0_0 = arith.constant 0 : index
    %0 = vector.load %arg1[%c0, %c0_0] : memref<8x128xbf16, #tpu.memory_space<vmem>>, vector<8x128xbf16>
    %c0_1 = arith.constant 0 : index
    %c0_2 = arith.constant 0 : index
    %1 = vector.load %arg2[%c0_1, %c0_2] : memref<128x128xbf16, #tpu.memory_space<vmem>>, vector<128x128xbf16>
    %cst = arith.constant dense<0.000000e+00> : vector<8x128xf32>
    %2 = tpu.matmul %0, %1, %cst {dimension_numbers = #tpu.dot_dimension_numbers<[1], [0], [0], [1], [0, 0, 1, 1], [], []>} : vector<8x128xbf16>, vector<128x128xbf16>, vector<8x128xf32> -> vector<8x128xf32>
    %c0_3 = arith.constant 0 : index
    %c0_4 = arith.constant 0 : index
    %3 = vector.load %arg3[%c0_3, %c0_4] : memref<1x128xf32, #tpu.memory_space<vmem>>, vector<1x128xf32>
    %4 = vector.broadcast %3 : vector<1x128xf32> to vector<8x128xf32>
    %5 = arith.addf %2, %4 : vector<8x128xf32>
    %cst_5 = arith.constant 0.00999999977 : f32
    %6 = vector.broadcast %cst_5 : f32 to vector<8x128xf32>
    %7 = arith.mulf %6, %5 : vector<8x128xf32>
    %8 = arith.maximumf %5, %7 : vector<8x128xf32>
    %9 = arith.truncf %8 : vector<8x128xf32> to vector<8x128xbf16>
    %c0_6 = arith.constant 0 : index
    %c0_7 = arith.constant 0 : index
    %10 = vector.load %arg4[%c0_6, %c0_7] : memref<128x128xbf16, #tpu.memory_space<vmem>>, vector<128x128xbf16>
    %cst_8 = arith.constant dense<0.000000e+00> : vector<8x128xf32>
    %11 = tpu.matmul %9, %10, %cst_8 {dimension_numbers = #tpu.dot_dimension_numbers<[1], [0], [0], [1], [0, 0, 1, 1], [], []>} : vector<8x128xbf16>, vector<128x128xbf16>, vector<8x128xf32> -> vector<8x128xf32>
    %c0_9 = arith.constant 0 : index
    %c0_10 = arith.constant 0 : index
    %12 = vector.load %arg5[%c0_9, %c0_10] : memref<1x128xf32, #tpu.memory_space<vmem>>, vector<1x128xf32>
    %13 = vector.broadcast %12 : vector<1x128xf32> to vector<8x128xf32>
    %14 = arith.addf %11, %13 : vector<8x128xf32>
    %cst_11 = arith.constant 0.00999999977 : f32
    %15 = vector.broadcast %cst_11 : f32 to vector<8x128xf32>
    %16 = arith.mulf %15, %14 : vector<8x128xf32>
    %17 = arith.maximumf %14, %16 : vector<8x128xf32>
    %18 = arith.truncf %17 : vector<8x128xf32> to vector<8x128xbf16>
    %c0_12 = arith.constant 0 : index
    %c0_13 = arith.constant 0 : index
    %19 = vector.load %arg6[%c0_12, %c0_13] : memref<128x128xbf16, #tpu.memory_space<vmem>>, vector<128x128xbf16>
    %cst_14 = arith.constant dense<0.000000e+00> : vector<8x128xf32>
    %20 = tpu.matmul %18, %19, %cst_14 {dimension_numbers = #tpu.dot_dimension_numbers<[1], [0], [0], [1], [0, 0, 1, 1], [], []>} : vector<8x128xbf16>, vector<128x128xbf16>, vector<8x128xf32> -> vector<8x128xf32>
    %c0_15 = arith.constant 0 : index
    %c0_16 = arith.constant 0 : index
    %21 = vector.load %arg7[%c0_15, %c0_16] : memref<1x128xf32, #tpu.memory_space<vmem>>, vector<1x128xf32>
    %22 = vector.broadcast %21 : vector<1x128xf32> to vector<8x128xf32>
    %23 = arith.addf %20, %22 : vector<8x128xf32>
    %24 = math.tanh %23 : vector<8x128xf32>
    %c0_17 = arith.constant 0 : index
    %c0_18 = arith.constant 0 : index
    %25 = vector.load %arg8[%c0_17, %c0_18] : memref<8x128xf32, #tpu.memory_space<vmem>>, vector<8x128xf32>
    tpu.vector_store %arg8[%c0_17, %c0_18], %24 {strides = array<i32>} : memref<8x128xf32, #tpu.memory_space<vmem>>, vector<8x128xf32>,
    return
  }
  func.func @transform_0(%arg0: i32) -> (i32, i32) {
    %c0_i32 = arith.constant 0 : i32
    %c0_i32_0 = arith.constant 0 : i32
    return %arg0, %c0_i32 : i32, i32
  }
  func.func @transform_1(%arg0: i32) -> (i32, i32) {
    %c0_i32 = arith.constant 0 : i32
    %c0_i32_0 = arith.constant 0 : i32
    %c0_i32_1 = arith.constant 0 : i32
    return %c0_i32, %c0_i32_0 : i32, i32
  }
  func.func @transform_2(%arg0: i32) -> (i32, i32) {
    %c0_i32 = arith.constant 0 : i32
    %c0_i32_0 = arith.constant 0 : i32
    %c0_i32_1 = arith.constant 0 : i32
    return %c0_i32, %c0_i32_0 : i32, i32
  }
  func.func @transform_3(%arg0: i32) -> (i32, i32) {
    %c0_i32 = arith.constant 0 : i32
    %c0_i32_0 = arith.constant 0 : i32
    %c0_i32_1 = arith.constant 0 : i32
    return %c0_i32, %c0_i32_0 : i32, i32
  }
  func.func @transform_4(%arg0: i32) -> (i32, i32) {
    %c0_i32 = arith.constant 0 : i32
    %c0_i32_0 = arith.constant 0 : i32
    %c0_i32_1 = arith.constant 0 : i32
    return %c0_i32, %c0_i32_0 : i32, i32
  }
  func.func @transform_5(%arg0: i32) -> (i32, i32) {
    %c0_i32 = arith.constant 0 : i32
    %c0_i32_0 = arith.constant 0 : i32
    %c0_i32_1 = arith.constant 0 : i32
    return %c0_i32, %c0_i32_0 : i32, i32
  }
  func.func @transform_6(%arg0: i32) -> (i32, i32) {
    %c0_i32 = arith.constant 0 : i32
    %c0_i32_0 = arith.constant 0 : i32
    %c0_i32_1 = arith.constant 0 : i32
    return %c0_i32, %c0_i32_0 : i32, i32
  }
  func.func @transform_7(%arg0: i32) -> (i32, i32) {
    %c0_i32 = arith.constant 0 : i32
    %c0_i32_0 = arith.constant 0 : i32
    return %arg0, %c0_i32 : i32, i32
  }
}

</mosaic_0001>

<llo_original>
// kernel: tpu_custom_call.1
$region0: #{tpu_custom_call.1}
  #allocation0 [shape = 'u32[]', space=smem, size = 0x4, offset = 0x4, fixed_abs, tag = 'smem constant byte address 0x4 - core index']
  #allocation1 [shape = 'u32[144,128]{1,0:T(1,128)}', space=vmem, size = 0x12000, scoped, tag = 'internal scratch']
  %s0 = inlined_call_operand.hbm [shape: bf16[8,128], index: 0, kind: input, shape index: {}]
  %s1 = inlined_call_operand.hbm [shape: bf16[128,128], index: 1, kind: input, shape index: {}]
  %s2 = inlined_call_operand.vmem [shape: f32[1,128], index: 2, kind: input, shape index: {}]
  %s3 = inlined_call_operand.hbm [shape: bf16[128,128], index: 3, kind: input, shape index: {}]
  %s4 = inlined_call_operand.vmem [shape: f32[1,128], index: 4, kind: input, shape index: {}]
  %s5 = inlined_call_operand.hbm [shape: bf16[128,128], index: 5, kind: input, shape index: {}]
  %s6 = inlined_call_operand.vmem [shape: f32[1,128], index: 6, kind: input, shape index: {}]
  %s7 = inlined_call_operand.hbm [shape: f32[8,128], index: 7, kind: output, shape index: {}]
  %s8 = sld [smem:[#allocation0]]
  $region54: #{tpu_custom_call.1} parent=0
    _
  %s10 = ssub.s32 1, %s8
  %s11 = scalar_select 0, %s10, %s8
  $region1: #{tpu_custom_call.1} parent=0
    #allocation2 [shape = 'u8[2048]{0}', space=vmem, size = 0x800, scoped, tag = 'input window, operand 0, single buffered']
    #allocation3 [shape = 's32[1]{0}', space=sflag, size = 0x4, scoped, tag = 'scoped memory for tpu_custom_call.1']
    #allocation4 [shape = 's32[1]{0}', space=sflag, size = 0x4, scoped, tag = 'scoped memory for tpu_custom_call.1']
    #allocation5 [shape = 'u8[32768]{0}', space=vmem, size = 0x8000, scoped, tag = 'input window, operand 1, single buffered']
    #allocation6 [shape = 's32[1]{0}', space=sflag, size = 0x4, scoped, tag = 'scoped memory for tpu_custom_call.1']
    #allocation7 [shape = 'u8[32768]{0}', space=vmem, size = 0x8000, scoped, tag = 'input window, operand 3, single buffered']
    #allocation8 [shape = 'u8[32768]{0}', space=vmem, size = 0x8000, scoped, tag = 'input window, operand 5, single buffered']
    #allocation9 [shape = 's32[1]{0}', space=sflag, size = 0x4, scoped, tag = 'scoped memory for tpu_custom_call.1']
    #allocation10 [shape = 'u8[4096]{0}', space=vmem, size = 0x1000, scoped, tag = 'output window, operand 0, single buffered']
    %12 = vsyncpa [#allocation3], 0
    %13 = vsyncpa [#allocation6], 0
    %14 = vsyncpa [#allocation9], 0
    %15 = vsyncpa [#allocation4], 0
    // Predicated region
    $region2: #{tpu_custom_call.1} parent=1 // pred_check
      _
    $region3: #{tpu_custom_call.1} parent=1 // pred_check_branch
      %17 = sbr.rel (0) target = $region5
    $region4: #{tpu_custom_call.1} parent=1 // pred_region
      %s19 = ssub.s32 64, 64
      %20 = vsyncadd [#allocation3], %s19
      %s22 = sshll.u32 [#allocation2], 4
      %s23 = int_to_ptr.vmem [resolvable:$true] %s22
      %25 = dma.hbm_to_vmem [thread:$0]  %s0, 64, %s23, [#allocation3]
    $region5: #{tpu_custom_call.1} parent=1 // pred_fallthru
      _
    // Predicated region
    $region6: #{tpu_custom_call.1} parent=1 // pred_check
      _
    $region7: #{tpu_custom_call.1} parent=1 // pred_check_branch
      %27 = sbr.rel (0) target = $region9
    $region8: #{tpu_custom_call.1} parent=1 // pred_region
      %s29 = ssub.s32 1024, 1024
      %30 = vsyncadd [#allocation6], %s29
      %s31 = sshll.u32 [#allocation5], 4
      %s32 = int_to_ptr.vmem [resolvable:$true] %s31
      %37 = dma.hbm_to_vmem [thread:$0]  %s1, 1024, %s32, [#allocation6], 64, 64, 4
    $region9: #{tpu_custom_call.1} parent=1 // pred_fallthru
      _
    // Predicated region
    $region10: #{tpu_custom_call.1} parent=1 // pred_check
      _
    $region11: #{tpu_custom_call.1} parent=1 // pred_check_branch
      %39 = sbr.rel (0) target = $region13
    $region12: #{tpu_custom_call.1} parent=1 // pred_region
      _
    $region13: #{tpu_custom_call.1} parent=1 // pred_fallthru
      _
    // Predicated region
    $region14: #{tpu_custom_call.1} parent=1 // pred_check
      _
    $region15: #{tpu_custom_call.1} parent=1 // pred_check_branch
      %41 = sbr.rel (0) target = $region17
    $region16: #{tpu_custom_call.1} parent=1 // pred_region
      %s43 = ssub.s32 1024, 1024
      %44 = vsyncadd [#allocation6], %s43
      %s45 = sshll.u32 [#allocation7], 4
      %s46 = int_to_ptr.vmem [resolvable:$true] %s45
      %51 = dma.hbm_to_vmem [thread:$0]  %s3, 1024, %s46, [#allocation6], 64, 64, 4
    $region17: #{tpu_custom_call.1} parent=1 // pred_fallthru
      _
    // Predicated region
    $region18: #{tpu_custom_call.1} parent=1 // pred_check
      _
    $region19: #{tpu_custom_call.1} parent=1 // pred_check_branch
      %53 = sbr.rel (0) target = $region21
    $region20: #{tpu_custom_call.1} parent=1 // pred_region
      _
    $region21: #{tpu_custom_call.1} parent=1 // pred_fallthru
      _
    // Predicated region
    $region22: #{tpu_custom_call.1} parent=1 // pred_check
      _
    $region23: #{tpu_custom_call.1} parent=1 // pred_check_branch
      %55 = sbr.rel (0) target = $region25
    $region24: #{tpu_custom_call.1} parent=1 // pred_region
      %s57 = ssub.s32 1024, 1024
      %58 = vsyncadd [#allocation9], %s57
      %s59 = sshll.u32 [#allocation8], 4
      %s60 = int_to_ptr.vmem [resolvable:$true] %s59
      %65 = dma.hbm_to_vmem [thread:$0]  %s5, 1024, %s60, [#allocation9], 64, 64, 4
    $region25: #{tpu_custom_call.1} parent=1 // pred_fallthru
      _
    // Predicated region
    $region26: #{tpu_custom_call.1} parent=1 // pred_check
      _
    $region27: #{tpu_custom_call.1} parent=1 // pred_check_branch
      %67 = sbr.rel (0) target = $region29
    $region28: #{tpu_custom_call.1} parent=1 // pred_region
      _
    $region29: #{tpu_custom_call.1} parent=1 // pred_fallthru
      _
    // Predicated region
    $region30: #{tpu_custom_call.1} parent=1 // pred_check
      _
    $region31: #{tpu_custom_call.1} parent=1 // pred_check_branch
      %69 = sbr.rel (0) target = $region33
    $region32: #{tpu_custom_call.1} parent=1 // pred_region
      %70 = dma.done [#allocation3], 64
    $region33: #{tpu_custom_call.1} parent=1 // pred_fallthru
      _
    // Predicated region
    $region34: #{tpu_custom_call.1} parent=1 // pred_check
      _
    $region35: #{tpu_custom_call.1} parent=1 // pred_check_branch
      %72 = sbr.rel (0) target = $region37
    $region36: #{tpu_custom_call.1} parent=1 // pred_region
      %73 = dma.done [#allocation6], 1024
    $region37: #{tpu_custom_call.1} parent=1 // pred_fallthru
      _
    // Predicated region
    $region38: #{tpu_custom_call.1} parent=1 // pred_check
      _
    $region39: #{tpu_custom_call.1} parent=1 // pred_check_branch
      %75 = sbr.rel (0) target = $region41
    $region40: #{tpu_custom_call.1} parent=1 // pred_region
      %76 = dma.done [#allocation6], 1024
    $region41: #{tpu_custom_call.1} parent=1 // pred_fallthru
      _
    // Predicated region
    $region42: #{tpu_custom_call.1} parent=1 // pred_check
      _
    $region43: #{tpu_custom_call.1} parent=1 // pred_check_branch
      %78 = sbr.rel (0) target = $region45
    $region44: #{tpu_custom_call.1} parent=1 // pred_region
      %79 = dma.done [#allocation9], 1024
    $region45: #{tpu_custom_call.1} parent=1 // pred_fallthru
      _
    %v81 = vld [vmem:[#allocation2] sm:$0xf]
    %v82 = vld [vmem:[#allocation5] sm:$0xf]
    %v83 = vld [vmem:[#allocation5 + $0x4] sm:$0xf]
    %v84 = vld [vmem:[#allocation5 + $0x8] sm:$0xf]
    %v85 = vld [vmem:[#allocation5 + $0xc] sm:$0xf]
    %v86 = vld [vmem:[#allocation5 + $0x10] sm:$0xf]
    %v87 = vld [vmem:[#allocation5 + $0x14] sm:$0xf]
    %v88 = vld [vmem:[#allocation5 + $0x18] sm:$0xf]
    %v89 = vld [vmem:[#allocation5 + $0x1c] sm:$0xf]
    %v90 = vld [vmem:[#allocation5 + $0x20] sm:$0xf]
    %v91 = vld [vmem:[#allocation5 + $0x24] sm:$0xf]
    %v92 = vld [vmem:[#allocation5 + $0x28] sm:$0xf]
    %v93 = vld [vmem:[#allocation5 + $0x2c] sm:$0xf]
    %v94 = vld [vmem:[#allocation5 + $0x30] sm:$0xf]
    %v95 = vld [vmem:[#allocation5 + $0x34] sm:$0xf]
    %v96 = vld [vmem:[#allocation5 + $0x38] sm:$0xf]
    %v97 = vld [vmem:[#allocation5 + $0x3c] sm:$0xf]
    %v98 = vld [vmem:[%s2] sm:$0x1]
    %v100 = vlaneseq
    %v101 = vshrl.u32 %v100, 7
    %v102 = vsub.s32 0, %v101
    %v103 = vrot.slane %v98, %v102
    %v121 = vunpack.c.l.b16 %v82
    %v122 = vunpack.c.l.b16 %v83
    %v123 = vunpack.c.l.b16 %v84
    %v124 = vunpack.c.l.b16 %v85
    %v125 = vunpack.c.l.b16 %v86
    %v126 = vunpack.c.l.b16 %v87
    %v127 = vunpack.c.l.b16 %v88
    %v128 = vunpack.c.l.b16 %v89
    %v129 = vunpack.c.l.b16 %v90
    %v130 = vunpack.c.l.b16 %v91
    %v131 = vunpack.c.l.b16 %v92
    %v132 = vunpack.c.l.b16 %v93
    %v133 = vunpack.c.l.b16 %v94
    %v134 = vunpack.c.l.b16 %v95
    %v135 = vunpack.c.l.b16 %v96
    %v136 = vunpack.c.l.b16 %v97
    %v137 = vpack.c.b16 %v122, %v121
    %v138 = vpack.c.b16 %v124, %v123
    %v139 = vpack.c.b16 %v126, %v125
    %v140 = vpack.c.b16 %v128, %v127
    %v141 = vpack.c.b16 %v130, %v129
    %v142 = vpack.c.b16 %v132, %v131
    %v143 = vpack.c.b16 %v134, %v133
    %v144 = vpack.c.b16 %v136, %v135
    %153 = vmatprep.subr.bf16.mxu0 0
    %154 = vmatpush1.bf16.msra.mxu0 %v137
    %155 = vmatprep.subr.bf16.mxu0 0
    %156 = vmatpush1.bf16.msra.mxu0 %v138
    %157 = vmatprep.subr.bf16.mxu0 0
    %158 = vmatpush1.bf16.msra.mxu0 %v139
    %159 = vmatprep.subr.bf16.mxu0 0
    %160 = vmatpush1.bf16.msra.mxu0 %v140
    %161 = vmatprep.subr.bf16.mxu0 0
    %162 = vmatpush1.bf16.msra.mxu0 %v141
    %163 = vmatprep.subr.bf16.mxu0 0
    %164 = vmatpush1.bf16.msra.mxu0 %v142
    %165 = vmatprep.subr.bf16.mxu0 0
    %166 = vmatpush1.bf16.msra.mxu0 %v143
    %167 = vmatprep.subr.bf16.mxu0 0
    %168 = vmatpush1.bf16.msra.mxu0 %v144
    %169 = vmatprep.subr.bf16.mxu0 0
    %170 = vmatpush1.bf16.msra.mxu0 0
    %171 = vmatprep.subr.bf16.mxu0 0
    %172 = vmatpush1.bf16.msra.mxu0 0
    %173 = vmatprep.subr.bf16.mxu0 0
    %174 = vmatpush1.bf16.msra.mxu0 0
    %175 = vmatprep.subr.bf16.mxu0 0
    %176 = vmatpush1.bf16.msra.mxu0 0
    %177 = vmatprep.subr.bf16.mxu0 0
    %178 = vmatpush1.bf16.msra.mxu0 0
    %179 = vmatprep.subr.bf16.mxu0 0
    %180 = vmatpush1.bf16.msra.mxu0 0
    %181 = vmatprep.subr.bf16.mxu0 0
    %182 = vmatpush1.bf16.msra.mxu0 0
    %183 = vmatprep.subr.bf16.mxu0 0
    %184 = vmatpush1.bf16.msra.mxu0 0
    %185 = vmatprep.mubr.bf16.mxu0 0
    %186 = vmatmul.mubr.bf16.gmra.mrb[0].mxu0 %v81
    %v187 = vpop.f32.mrb[0].mxu0
    %v188 = vadd.f32 %v103, %v187
    %v189 = vpop.f32.mrb[0].mxu0
    %v190 = vpop.f32.mrb[0].mxu0
    %v191 = vpop.f32.mrb[0].mxu0
    %192 = vdwg.mxu0
    %v193 = vmul.f32 %v188, 0.01
    %v194 = vmax.f32 %v188, %v193
    %v195 = vpack.c.bf16 %v194, %v194
    %v196 = vld [vmem:[#allocation7] sm:$0xf]
    %v197 = vld [vmem:[#allocation7 + $0x4] sm:$0xf]
    %v198 = vld [vmem:[#allocation7 + $0x8] sm:$0xf]
    %v199 = vld [vmem:[#allocation7 + $0xc] sm:$0xf]
    %v200 = vld [vmem:[#allocation7 + $0x10] sm:$0xf]
    %v201 = vld [vmem:[#allocation7 + $0x14] sm:$0xf]
    %v202 = vld [vmem:[#allocation7 + $0x18] sm:$0xf]
    %v203 = vld [vmem:[#allocation7 + $0x1c] sm:$0xf]
    %v204 = vld [vmem:[#allocation7 + $0x20] sm:$0xf]
    %v205 = vld [vmem:[#allocation7 + $0x24] sm:$0xf]
    %v206 = vld [vmem:[#allocation7 + $0x28] sm:$0xf]
    %v207 = vld [vmem:[#allocation7 + $0x2c] sm:$0xf]
    %v208 = vld [vmem:[#allocation7 + $0x30] sm:$0xf]
    %v209 = vld [vmem:[#allocation7 + $0x34] sm:$0xf]
    %v210 = vld [vmem:[#allocation7 + $0x38] sm:$0xf]
    %v211 = vld [vmem:[#allocation7 + $0x3c] sm:$0xf]
    %v212 = vld [vmem:[%s4] sm:$0x1]
    %v214 = vlaneseq
    %v215 = vshrl.u32 %v214, 7
    %v216 = vsub.s32 0, %v215
    %v217 = vrot.slane %v212, %v216
    %v235 = vunpack.c.l.b16 %v196
    %v236 = vunpack.c.l.b16 %v197
    %v237 = vunpack.c.l.b16 %v198
    %v238 = vunpack.c.l.b16 %v199
    %v239 = vunpack.c.l.b16 %v200
    %v240 = vunpack.c.l.b16 %v201
    %v241 = vunpack.c.l.b16 %v202
    %v242 = vunpack.c.l.b16 %v203
    %v243 = vunpack.c.l.b16 %v204
    %v244 = vunpack.c.l.b16 %v205
    %v245 = vunpack.c.l.b16 %v206
    %v246 = vunpack.c.l.b16 %v207
    %v247 = vunpack.c.l.b16 %v208
    %v248 = vunpack.c.l.b16 %v209
    %v249 = vunpack.c.l.b16 %v210
    %v250 = vunpack.c.l.b16 %v211
    %v251 = vpack.c.b16 %v236, %v235
    %v252 = vpack.c.b16 %v238, %v237
    %v253 = vpack.c.b16 %v240, %v239
    %v254 = vpack.c.b16 %v242, %v241
    %v255 = vpack.c.b16 %v244, %v243
    %v256 = vpack.c.b16 %v246, %v245
    %v257 = vpack.c.b16 %v248, %v247
    %v258 = vpack.c.b16 %v250, %v249
    %267 = vmatprep.subr.bf16.mxu0 0
    %268 = vmatpush1.bf16.msra.mxu0 %v251
    %269 = vmatprep.subr.bf16.mxu0 0
    %270 = vmatpush1.bf16.msra.mxu0 %v252
    %271 = vmatprep.subr.bf16.mxu0 0
    %272 = vmatpush1.bf16.msra.mxu0 %v253
    %273 = vmatprep.subr.bf16.mxu0 0
    %274 = vmatpush1.bf16.msra.mxu0 %v254
    %275 = vmatprep.subr.bf16.mxu0 0
    %276 = vmatpush1.bf16.msra.mxu0 %v255
    %277 = vmatprep.subr.bf16.mxu0 0
    %278 = vmatpush1.bf16.msra.mxu0 %v256
    %279 = vmatprep.subr.bf16.mxu0 0
    %280 = vmatpush1.bf16.msra.mxu0 %v257
    %281 = vmatprep.subr.bf16.mxu0 0
    %282 = vmatpush1.bf16.msra.mxu0 %v258
    %283 = vmatprep.subr.bf16.mxu0 0
    %284 = vmatpush1.bf16.msra.mxu0 0
    %285 = vmatprep.subr.bf16.mxu0 0
    %286 = vmatpush1.bf16.msra.mxu0 0
    %287 = vmatprep.subr.bf16.mxu0 0
    %288 = vmatpush1.bf16.msra.mxu0 0
    %289 = vmatprep.subr.bf16.mxu0 0
    %290 = vmatpush1.bf16.msra.mxu0 0
    %291 = vmatprep.subr.bf16.mxu0 0
    %292 = vmatpush1.bf16.msra.mxu0 0
    %293 = vmatprep.subr.bf16.mxu0 0
    %294 = vmatpush1.bf16.msra.mxu0 0
    %295 = vmatprep.subr.bf16.mxu0 0
    %296 = vmatpush1.bf16.msra.mxu0 0
    %297 = vmatprep.subr.bf16.mxu0 0
    %298 = vmatpush1.bf16.msra.mxu0 0
    %299 = vmatprep.mubr.bf16.mxu0 0
    %300 = vmatmul.mubr.bf16.gmra.mrb[0].mxu0 %v195
    %v301 = vpop.f32.mrb[0].mxu0
    %v302 = vadd.f32 %v217, %v301
    %v303 = vpop.f32.mrb[0].mxu0
    %v304 = vpop.f32.mrb[0].mxu0
    %v305 = vpop.f32.mrb[0].mxu0
    %306 = vdwg.mxu0
    %v307 = vmul.f32 %v302, 0.01
    %v308 = vmax.f32 %v302, %v307
    %v309 = vpack.c.bf16 %v308, %v308
    %v310 = vld [vmem:[#allocation8] sm:$0xf]
    %v311 = vld [vmem:[#allocation8 + $0x4] sm:$0xf]
    %v312 = vld [vmem:[#allocation8 + $0x8] sm:$0xf]
    %v313 = vld [vmem:[#allocation8 + $0xc] sm:$0xf]
    %v314 = vld [vmem:[#allocation8 + $0x10] sm:$0xf]
    %v315 = vld [vmem:[#allocation8 + $0x14] sm:$0xf]
    %v316 = vld [vmem:[#allocation8 + $0x18] sm:$0xf]
    %v317 = vld [vmem:[#allocation8 + $0x1c] sm:$0xf]
    %v318 = vld [vmem:[#allocation8 + $0x20] sm:$0xf]
    %v319 = vld [vmem:[#allocation8 + $0x24] sm:$0xf]
    %v320 = vld [vmem:[#allocation8 + $0x28] sm:$0xf]
    %v321 = vld [vmem:[#allocation8 + $0x2c] sm:$0xf]
    %v322 = vld [vmem:[#allocation8 + $0x30] sm:$0xf]
    %v323 = vld [vmem:[#allocation8 + $0x34] sm:$0xf]
    %v324 = vld [vmem:[#allocation8 + $0x38] sm:$0xf]
    %v325 = vld [vmem:[#allocation8 + $0x3c] sm:$0xf]
    %v326 = vld [vmem:[%s6] sm:$0x1]
    %v328 = vlaneseq
    %v329 = vshrl.u32 %v328, 7
    %v330 = vsub.s32 0, %v329
    %v331 = vrot.slane %v326, %v330
    %v349 = vunpack.c.l.b16 %v310
    %v350 = vunpack.c.l.b16 %v311
    %v351 = vunpack.c.l.b16 %v312
    %v352 = vunpack.c.l.b16 %v313
    %v353 = vunpack.c.l.b16 %v314
    %v354 = vunpack.c.l.b16 %v315
    %v355 = vunpack.c.l.b16 %v316
    %v356 = vunpack.c.l.b16 %v317
    %v357 = vunpack.c.l.b16 %v318
    %v358 = vunpack.c.l.b16 %v319
    %v359 = vunpack.c.l.b16 %v320
    %v360 = vunpack.c.l.b16 %v321
    %v361 = vunpack.c.l.b16 %v322
    %v362 = vunpack.c.l.b16 %v323
    %v363 = vunpack.c.l.b16 %v324
    %v364 = vunpack.c.l.b16 %v325
    %v365 = vpack.c.b16 %v350, %v349
    %v366 = vpack.c.b16 %v352, %v351
    %v367 = vpack.c.b16 %v354, %v353
    %v368 = vpack.c.b16 %v356, %v355
    %v369 = vpack.c.b16 %v358, %v357
    %v370 = vpack.c.b16 %v360, %v359
    %v371 = vpack.c.b16 %v362, %v361
    %v372 = vpack.c.b16 %v364, %v363
    %381 = vmatprep.subr.bf16.mxu0 0
    %382 = vmatpush1.bf16.msra.mxu0 %v365
    %383 = vmatprep.subr.bf16.mxu0 0
    %384 = vmatpush1.bf16.msra.mxu0 %v366
    %385 = vmatprep.subr.bf16.mxu0 0
    %386 = vmatpush1.bf16.msra.mxu0 %v367
    %387 = vmatprep.subr.bf16.mxu0 0
    %388 = vmatpush1.bf16.msra.mxu0 %v368
    %389 = vmatprep.subr.bf16.mxu0 0
    %390 = vmatpush1.bf16.msra.mxu0 %v369
    %391 = vmatprep.subr.bf16.mxu0 0
    %392 = vmatpush1.bf16.msra.mxu0 %v370
    %393 = vmatprep.subr.bf16.mxu0 0
    %394 = vmatpush1.bf16.msra.mxu0 %v371
    %395 = vmatprep.subr.bf16.mxu0 0
    %396 = vmatpush1.bf16.msra.mxu0 %v372
    %397 = vmatprep.subr.bf16.mxu0 0
    %398 = vmatpush1.bf16.msra.mxu0 0
    %399 = vmatprep.subr.bf16.mxu0 0
    %400 = vmatpush1.bf16.msra.mxu0 0
    %401 = vmatprep.subr.bf16.mxu0 0
    %402 = vmatpush1.bf16.msra.mxu0 0
    %403 = vmatprep.subr.bf16.mxu0 0
    %404 = vmatpush1.bf16.msra.mxu0 0
    %405 = vmatprep.subr.bf16.mxu0 0
    %406 = vmatpush1.bf16.msra.mxu0 0
    %407 = vmatprep.subr.bf16.mxu0 0
    %408 = vmatpush1.bf16.msra.mxu0 0
    %409 = vmatprep.subr.bf16.mxu0 0
    %410 = vmatpush1.bf16.msra.mxu0 0
    %411 = vmatprep.subr.bf16.mxu0 0
    %412 = vmatpush1.bf16.msra.mxu0 0
    %413 = vmatprep.mubr.bf16.mxu0 0
    %414 = vmatmul.mubr.bf16.gmra.mrb[0].mxu0 %v309
    %v415 = vpop.f32.mrb[0].mxu0
    %v416 = vadd.f32 %v331, %v415
    %v417 = vpop.f32.mrb[0].mxu0
    %v418 = vpop.f32.mrb[0].mxu0
    %v419 = vpop.f32.mrb[0].mxu0
    %420 = vdwg.mxu0
    %v421 = vtanh.pop %v416
    %422 = vst [vmem:[#allocation10] sm:$0xff] %v421
    // Predicated region
    $region46: #{tpu_custom_call.1} parent=1 // pred_check
      _
    $region47: #{tpu_custom_call.1} parent=1 // pred_check_branch
      %424 = sbr.rel (0) target = $region49
    $region48: #{tpu_custom_call.1} parent=1 // pred_region
      %s426 = ssub.s32 128, 128
      %427 = vsyncadd [#allocation4], %s426
      %s429 = sshll.u32 [#allocation10], 4
      %s430 = int_to_ptr.vmem [resolvable:$true] %s429
      %432 = dma.vmem_to_hbm [thread:$0]  %s430, 128, %s7, [#allocation4]
    $region49: #{tpu_custom_call.1} parent=1 // pred_fallthru
      _
    // Predicated region
    $region50: #{tpu_custom_call.1} parent=1 // pred_check
      _
    $region51: #{tpu_custom_call.1} parent=1 // pred_check_branch
      %434 = sbr.rel (0) target = $region53
    $region52: #{tpu_custom_call.1} parent=1 // pred_region
      %435 = dma.done [#allocation4], 128
    $region53: #{tpu_custom_call.1} parent=1 // pred_fallthru
      _
    %436 = vsyncpa [#allocation3], 1
    %437 = vsyncpa [#allocation6], 1
    %438 = vsyncpa [#allocation9], 1
    %439 = vsyncpa [#allocation4], 1

// kernel: tpu_custom_call.1
$region0: #{tpu_custom_call.1}
  #allocation0 [shape = 'u32[]', space=smem, size = 0x4, offset = 0x4, fixed_abs, tag = 'smem constant byte address 0x4 - core index']
  #allocation1 [shape = 'u32[144,128]{1,0:T(1,128)}', space=vmem, size = 0x12000, scoped, tag = 'internal scratch']
  %s0 = inlined_call_operand.hbm [shape: bf16[8,128], index: 0, kind: input, shape index: {}]
  %s1 = inlined_call_operand.hbm [shape: bf16[128,128], index: 1, kind: input, shape index: {}]
  %s2 = inlined_call_operand.vmem [shape: f32[1,128], index: 2, kind: input, shape index: {}]
  %s3 = inlined_call_operand.hbm [shape: bf16[128,128], index: 3, kind: input, shape index: {}]
  %s4 = inlined_call_operand.vmem [shape: f32[1,128], index: 4, kind: input, shape index: {}]
  %s5 = inlined_call_operand.hbm [shape: bf16[128,128], index: 5, kind: input, shape index: {}]
  %s6 = inlined_call_operand.vmem [shape: f32[1,128], index: 6, kind: input, shape index: {}]
  %s7 = inlined_call_operand.hbm [shape: f32[8,128], index: 7, kind: output, shape index: {}]
  %s8 = sld [smem:[#allocation0]]
  $region54: #{tpu_custom_call.1} parent=0
    _
  %s10 = ssub.s32 1, %s8
  %s11 = scalar_select 0, %s10, %s8
  $region1: #{tpu_custom_call.1} parent=0
    #allocation2 [shape = 'u8[2048]{0}', space=vmem, size = 0x800, scoped, tag = 'input window, operand 0, single buffered']
    #allocation3 [shape = 's32[1]{0}', space=sflag, size = 0x4, scoped, tag = 'scoped memory for tpu_custom_call.1']
    #allocation4 [shape = 's32[1]{0}', space=sflag, size = 0x4, scoped, tag = 'scoped memory for tpu_custom_call.1']
    #allocation5 [shape = 'u8[32768]{0}', space=vmem, size = 0x8000, scoped, tag = 'input window, operand 1, single buffered']
    #allocation6 [shape = 's32[1]{0}', space=sflag, size = 0x4, scoped, tag = 'scoped memory for tpu_custom_call.1']
    #allocation7 [shape = 'u8[32768]{0}', space=vmem, size = 0x8000, scoped, tag = 'input window, operand 3, single buffered']
    #allocation8 [shape = 'u8[32768]{0}', space=vmem, size = 0x8000, scoped, tag = 'input window, operand 5, single buffered']
    #allocation9 [shape = 's32[1]{0}', space=sflag, size = 0x4, scoped, tag = 'scoped memory for tpu_custom_call.1']
    #allocation10 [shape = 'u8[4096]{0}', space=vmem, size = 0x1000, scoped, tag = 'output window, operand 0, single buffered']
    %12 = vsyncpa [#allocation3], 0
    %13 = vsyncpa [#allocation6], 0
    %14 = vsyncpa [#allocation9], 0
    %15 = vsyncpa [#allocation4], 0
    // Predicated region
    $region2: #{tpu_custom_call.1} parent=1 // pred_check
      _
    $region3: #{tpu_custom_call.1} parent=1 // pred_check_branch
      %17 = sbr.rel (0) target = $region5
    $region4: #{tpu_custom_call.1} parent=1 // pred_region
      %s19 = ssub.s32 64, 64
      %20 = vsyncadd [#allocation3], %s19
      %s22 = sshll.u32 [#allocation2], 4
      %s23 = int_to_ptr.vmem [resolvable:$true] %s22
      %25 = dma.hbm_to_vmem [thread:$0]  %s0, 64, %s23, [#allocation3]
    $region5: #{tpu_custom_call.1} parent=1 // pred_fallthru
      _
    // Predicated region
    $region6: #{tpu_custom_call.1} parent=1 // pred_check
      _
    $region7: #{tpu_custom_call.1} parent=1 // pred_check_branch
      %27 = sbr.rel (0) target = $region9
    $region8: #{tpu_custom_call.1} parent=1 // pred_region
      %s29 = ssub.s32 1024, 1024
      %30 = vsyncadd [#allocation6], %s29
      %s31 = sshll.u32 [#allocation5], 4
      %s32 = int_to_ptr.vmem [resolvable:$true] %s31
      %37 = dma.hbm_to_vmem [thread:$0]  %s1, 1024, %s32, [#allocation6], 64, 64, 4
    $region9: #{tpu_custom_call.1} parent=1 // pred_fallthru
      _
    // Predicated region
    $region10: #{tpu_custom_call.1} parent=1 // pred_check
      _
    $region11: #{tpu_custom_call.1} parent=1 // pred_check_branch
      %39 = sbr.rel (0) target = $region13
    $region12: #{tpu_custom_call.1} parent=1 // pred_region
      _
    $region13: #{tpu_custom_call.1} parent=1 // pred_fallthru
      _
    // Predicated region
    $region14: #{tpu_custom_call.1} parent=1 // pred_check
      _
    $region15: #{tpu_custom_call.1} parent=1 // pred_check_branch
      %41 = sbr.rel (0) target = $region17
    $region16: #{tpu_custom_call.1} parent=1 // pred_region
      %s43 = ssub.s32 1024, 1024
      %44 = vsyncadd [#allocation6], %s43
      %s45 = sshll.u32 [#allocation7], 4
      %s46 = int_to_ptr.vmem [resolvable:$true] %s45
      %51 = dma.hbm_to_vmem [thread:$0]  %s3, 1024, %s46, [#allocation6], 64, 64, 4
    $region17: #{tpu_custom_call.1} parent=1 // pred_fallthru
      _
    // Predicated region
    $region18: #{tpu_custom_call.1} parent=1 // pred_check
      _
    $region19: #{tpu_custom_call.1} parent=1 // pred_check_branch
      %53 = sbr.rel (0) target = $region21
    $region20: #{tpu_custom_call.1} parent=1 // pred_region
      _
    $region21: #{tpu_custom_call.1} parent=1 // pred_fallthru
      _
    // Predicated region
    $region22: #{tpu_custom_call.1} parent=1 // pred_check
      _
    $region23: #{tpu_custom_call.1} parent=1 // pred_check_branch
      %55 = sbr.rel (0) target = $region25
    $region24: #{tpu_custom_call.1} parent=1 // pred_region
      %s57 = ssub.s32 1024, 1024
      %58 = vsyncadd [#allocation9], %s57
      %s59 = sshll.u32 [#allocation8], 4
      %s60 = int_to_ptr.vmem [resolvable:$true] %s59
      %65 = dma.hbm_to_vmem [thread:$0]  %s5, 1024, %s60, [#allocation9], 64, 64, 4
    $region25: #{tpu_custom_call.1} parent=1 // pred_fallthru
      _
    // Predicated region
    $region26: #{tpu_custom_call.1} parent=1 // pred_check
      _
    $region27: #{tpu_custom_call.1} parent=1 // pred_check_branch
      %67 = sbr.rel (0) target = $region29
    $region28: #{tpu_custom_call.1} parent=1 // pred_region
      _
    $region29: #{tpu_custom_call.1} parent=1 // pred_fallthru
      _
    // Predicated region
    $region30: #{tpu_custom_call.1} parent=1 // pred_check
      _
    $region31: #{tpu_custom_call.1} parent=1 // pred_check_branch
      %69 = sbr.rel (0) target = $region33
    $region32: #{tpu_custom_call.1} parent=1 // pred_region
      %70 = dma.done [#allocation3], 64
    $region33: #{tpu_custom_call.1} parent=1 // pred_fallthru
      _
    // Predicated region
    $region34: #{tpu_custom_call.1} parent=1 // pred_check
      _
    $region35: #{tpu_custom_call.1} parent=1 // pred_check_branch
      %72 = sbr.rel (0) target = $region37
    $region36: #{tpu_custom_call.1} parent=1 // pred_region
      %73 = dma.done [#allocation6], 1024
    $region37: #{tpu_custom_call.1} parent=1 // pred_fallthru
      _
    // Predicated region
    $region38: #{tpu_custom_call.1} parent=1 // pred_check
      _
    $region39: #{tpu_custom_call.1} parent=1 // pred_check_branch
      %75 = sbr.rel (0) target = $region41
    $region40: #{tpu_custom_call.1} parent=1 // pred_region
      %76 = dma.done [#allocation6], 1024
    $region41: #{tpu_custom_call.1} parent=1 // pred_fallthru
      _
    // Predicated region
    $region42: #{tpu_custom_call.1} parent=1 // pred_check
      _
    $region43: #{tpu_custom_call.1} parent=1 // pred_check_branch
      %78 = sbr.rel (0) target = $region45
    $region44: #{tpu_custom_call.1} parent=1 // pred_region
      %79 = dma.done [#allocation9], 1024
    $region45: #{tpu_custom_call.1} parent=1 // pred_fallthru
      _
    %v81 = vld [vmem:[#allocation2] sm:$0xf]
    %v82 = vld [vmem:[#allocation5] sm:$0xf]
    %v83 = vld [vmem:[#allocation5 + $0x4] sm:$0xf]
    %v84 = vld [vmem:[#allocation5 + $0x8] sm:$0xf]
    %v85 = vld [vmem:[#allocation5 + $0xc] sm:$0xf]
    %v86 = vld [vmem:[#allocation5 + $0x10] sm:$0xf]
    %v87 = vld [vmem:[#allocation5 + $0x14] sm:$0xf]
    %v88 = vld [vmem:[#allocation5 + $0x18] sm:$0xf]
    %v89 = vld [vmem:[#allocation5 + $0x1c] sm:$0xf]
    %v90 = vld [vmem:[#allocation5 + $0x20] sm:$0xf]
    %v91 = vld [vmem:[#allocation5 + $0x24] sm:$0xf]
    %v92 = vld [vmem:[#allocation5 + $0x28] sm:$0xf]
    %v93 = vld [vmem:[#allocation5 + $0x2c] sm:$0xf]
    %v94 = vld [vmem:[#allocation5 + $0x30] sm:$0xf]
    %v95 = vld [vmem:[#allocation5 + $0x34] sm:$0xf]
    %v96 = vld [vmem:[#allocation5 + $0x38] sm:$0xf]
    %v97 = vld [vmem:[#allocation5 + $0x3c] sm:$0xf]
    %v98 = vld [vmem:[%s2] sm:$0x1]
    %v100 = vlaneseq
    %v101 = vshrl.u32 %v100, 7
    %v102 = vsub.s32 0, %v101
    %v103 = vrot.slane %v98, %v102
    %v121 = vunpack.c.l.b16 %v82
    %v122 = vunpack.c.l.b16 %v83
    %v123 = vunpack.c.l.b16 %v84
    %v124 = vunpack.c.l.b16 %v85
    %v125 = vunpack.c.l.b16 %v86
    %v126 = vunpack.c.l.b16 %v87
    %v127 = vunpack.c.l.b16 %v88
    %v128 = vunpack.c.l.b16 %v89
    %v129 = vunpack.c.l.b16 %v90
    %v130 = vunpack.c.l.b16 %v91
    %v131 = vunpack.c.l.b16 %v92
    %v132 = vunpack.c.l.b16 %v93
    %v133 = vunpack.c.l.b16 %v94
    %v134 = vunpack.c.l.b16 %v95
    %v135 = vunpack.c.l.b16 %v96
    %v136 = vunpack.c.l.b16 %v97
    %v137 = vpack.c.b16 %v122, %v121
    %v138 = vpack.c.b16 %v124, %v123
    %v139 = vpack.c.b16 %v126, %v125
    %v140 = vpack.c.b16 %v128, %v127
    %v141 = vpack.c.b16 %v130, %v129
    %v142 = vpack.c.b16 %v132, %v131
    %v143 = vpack.c.b16 %v134, %v133
    %v144 = vpack.c.b16 %v136, %v135
    %153 = vmatprep.subr.bf16.mxu0 0
    %154 = vmatpush1.bf16.msra.mxu0 %v137
    %155 = vmatprep.subr.bf16.mxu0 0
    %156 = vmatpush1.bf16.msra.mxu0 %v138
    %157 = vmatprep.subr.bf16.mxu0 0
    %158 = vmatpush1.bf16.msra.mxu0 %v139
    %159 = vmatprep.subr.bf16.mxu0 0
    %160 = vmatpush1.bf16.msra.mxu0 %v140
    %161 = vmatprep.subr.bf16.mxu0 0
    %162 = vmatpush1.bf16.msra.mxu0 %v141
    %163 = vmatprep.subr.bf16.mxu0 0
    %164 = vmatpush1.bf16.msra.mxu0 %v142
    %165 = vmatprep.subr.bf16.mxu0 0
    %166 = vmatpush1.bf16.msra.mxu0 %v143
    %167 = vmatprep.subr.bf16.mxu0 0
    %168 = vmatpush1.bf16.msra.mxu0 %v144
    %169 = vmatprep.subr.bf16.mxu0 0
    %170 = vmatpush1.bf16.msra.mxu0 0
    %171 = vmatprep.subr.bf16.mxu0 0
    %172 = vmatpush1.bf16.msra.mxu0 0
    %173 = vmatprep.subr.bf16.mxu0 0
    %174 = vmatpush1.bf16.msra.mxu0 0
    %175 = vmatprep.subr.bf16.mxu0 0
    %176 = vmatpush1.bf16.msra.mxu0 0
    %177 = vmatprep.subr.bf16.mxu0 0
    %178 = vmatpush1.bf16.msra.mxu0 0
    %179 = vmatprep.subr.bf16.mxu0 0
    %180 = vmatpush1.bf16.msra.mxu0 0
    %181 = vmatprep.subr.bf16.mxu0 0
    %182 = vmatpush1.bf16.msra.mxu0 0
    %183 = vmatprep.subr.bf16.mxu0 0
    %184 = vmatpush1.bf16.msra.mxu0 0
    %185 = vmatprep.mubr.bf16.mxu0 0
    %186 = vmatmul.mubr.bf16.gmra.mrb[0].mxu0 %v81
    %v187 = vpop.f32.mrb[0].mxu0
    %v188 = vadd.f32 %v103, %v187
    %v189 = vpop.f32.mrb[0].mxu0
    %v190 = vpop.f32.mrb[0].mxu0
    %v191 = vpop.f32.mrb[0].mxu0
    %192 = vdwg.mxu0
    %v193 = vmul.f32 %v188, 0.01
    %v194 = vmax.f32 %v188, %v193
    %v195 = vpack.c.bf16 %v194, %v194
    %v196 = vld [vmem:[#allocation7] sm:$0xf]
    %v197 = vld [vmem:[#allocation7 + $0x4] sm:$0xf]
    %v198 = vld [vmem:[#allocation7 + $0x8] sm:$0xf]
    %v199 = vld [vmem:[#allocation7 + $0xc] sm:$0xf]
    %v200 = vld [vmem:[#allocation7 + $0x10] sm:$0xf]
    %v201 = vld [vmem:[#allocation7 + $0x14] sm:$0xf]
    %v202 = vld [vmem:[#allocation7 + $0x18] sm:$0xf]
    %v203 = vld [vmem:[#allocation7 + $0x1c] sm:$0xf]
    %v204 = vld [vmem:[#allocation7 + $0x20] sm:$0xf]
    %v205 = vld [vmem:[#allocation7 + $0x24] sm:$0xf]
    %v206 = vld [vmem:[#allocation7 + $0x28] sm:$0xf]
    %v207 = vld [vmem:[#allocation7 + $0x2c] sm:$0xf]
    %v208 = vld [vmem:[#allocation7 + $0x30] sm:$0xf]
    %v209 = vld [vmem:[#allocation7 + $0x34] sm:$0xf]
    %v210 = vld [vmem:[#allocation7 + $0x38] sm:$0xf]
    %v211 = vld [vmem:[#allocation7 + $0x3c] sm:$0xf]
    %v212 = vld [vmem:[%s4] sm:$0x1]
    %v214 = vlaneseq
    %v215 = vshrl.u32 %v214, 7
    %v216 = vsub.s32 0, %v215
    %v217 = vrot.slane %v212, %v216
    %v235 = vunpack.c.l.b16 %v196
    %v236 = vunpack.c.l.b16 %v197
    %v237 = vunpack.c.l.b16 %v198
    %v238 = vunpack.c.l.b16 %v199
    %v239 = vunpack.c.l.b16 %v200
    %v240 = vunpack.c.l.b16 %v201
    %v241 = vunpack.c.l.b16 %v202
    %v242 = vunpack.c.l.b16 %v203
    %v243 = vunpack.c.l.b16 %v204
    %v244 = vunpack.c.l.b16 %v205
    %v245 = vunpack.c.l.b16 %v206
    %v246 = vunpack.c.l.b16 %v207
    %v247 = vunpack.c.l.b16 %v208
    %v248 = vunpack.c.l.b16 %v209
    %v249 = vunpack.c.l.b16 %v210
    %v250 = vunpack.c.l.b16 %v211
    %v251 = vpack.c.b16 %v236, %v235
    %v252 = vpack.c.b16 %v238, %v237
    %v253 = vpack.c.b16 %v240, %v239
    %v254 = vpack.c.b16 %v242, %v241
    %v255 = vpack.c.b16 %v244, %v243
    %v256 = vpack.c.b16 %v246, %v245
    %v257 = vpack.c.b16 %v248, %v247
    %v258 = vpack.c.b16 %v250, %v249
    %267 = vmatprep.subr.bf16.mxu0 0
    %268 = vmatpush1.bf16.msra.mxu0 %v251
    %269 = vmatprep.subr.bf16.mxu0 0
    %270 = vmatpush1.bf16.msra.mxu0 %v252
    %271 = vmatprep.subr.bf16.mxu0 0
    %272 = vmatpush1.bf16.msra.mxu0 %v253
    %273 = vmatprep.subr.bf16.mxu0 0
    %274 = vmatpush1.bf16.msra.mxu0 %v254
    %275 = vmatprep.subr.bf16.mxu0 0
    %276 = vmatpush1.bf16.msra.mxu0 %v255
    %277 = vmatprep.subr.bf16.mxu0 0
    %278 = vmatpush1.bf16.msra.mxu0 %v256
    %279 = vmatprep.subr.bf16.mxu0 0
    %280 = vmatpush1.bf16.msra.mxu0 %v257
    %281 = vmatprep.subr.bf16.mxu0 0
    %282 = vmatpush1.bf16.msra.mxu0 %v258
    %283 = vmatprep.subr.bf16.mxu0 0
    %284 = vmatpush1.bf16.msra.mxu0 0
    %285 = vmatprep.subr.bf16.mxu0 0
    %286 = vmatpush1.bf16.msra.mxu0 0
    %287 = vmatprep.subr.bf16.mxu0 0
    %288 = vmatpush1.bf16.msra.mxu0 0
    %289 = vmatprep.subr.bf16.mxu0 0
    %290 = vmatpush1.bf16.msra.mxu0 0
    %291 = vmatprep.subr.bf16.mxu0 0
    %292 = vmatpush1.bf16.msra.mxu0 0
    %293 = vmatprep.subr.bf16.mxu0 0
    %294 = vmatpush1.bf16.msra.mxu0 0
    %295 = vmatprep.subr.bf16.mxu0 0
    %296 = vmatpush1.bf16.msra.mxu0 0
    %297 = vmatprep.subr.bf16.mxu0 0
    %298 = vmatpush1.bf16.msra.mxu0 0
    %299 = vmatprep.mubr.bf16.mxu0 0
    %300 = vmatmul.mubr.bf16.gmra.mrb[0].mxu0 %v195
    %v301 = vpop.f32.mrb[0].mxu0
    %v302 = vadd.f32 %v217, %v301
    %v303 = vpop.f32.mrb[0].mxu0
    %v304 = vpop.f32.mrb[0].mxu0
    %v305 = vpop.f32.mrb[0].mxu0
    %306 = vdwg.mxu0
    %v307 = vmul.f32 %v302, 0.01
    %v308 = vmax.f32 %v302, %v307
    %v309 = vpack.c.bf16 %v308, %v308
    %v310 = vld [vmem:[#allocation8] sm:$0xf]
    %v311 = vld [vmem:[#allocation8 + $0x4] sm:$0xf]
    %v312 = vld [vmem:[#allocation8 + $0x8] sm:$0xf]
    %v313 = vld [vmem:[#allocation8 + $0xc] sm:$0xf]
    %v314 = vld [vmem:[#allocation8 + $0x10] sm:$0xf]
    %v315 = vld [vmem:[#allocation8 + $0x14] sm:$0xf]
    %v316 = vld [vmem:[#allocation8 + $0x18] sm:$0xf]
    %v317 = vld [vmem:[#allocation8 + $0x1c] sm:$0xf]
    %v318 = vld [vmem:[#allocation8 + $0x20] sm:$0xf]
    %v319 = vld [vmem:[#allocation8 + $0x24] sm:$0xf]
    %v320 = vld [vmem:[#allocation8 + $0x28] sm:$0xf]
    %v321 = vld [vmem:[#allocation8 + $0x2c] sm:$0xf]
    %v322 = vld [vmem:[#allocation8 + $0x30] sm:$0xf]
    %v323 = vld [vmem:[#allocation8 + $0x34] sm:$0xf]
    %v324 = vld [vmem:[#allocation8 + $0x38] sm:$0xf]
    %v325 = vld [vmem:[#allocation8 + $0x3c] sm:$0xf]
    %v326 = vld [vmem:[%s6] sm:$0x1]
    %v328 = vlaneseq
    %v329 = vshrl.u32 %v328, 7
    %v330 = vsub.s32 0, %v329
    %v331 = vrot.slane %v326, %v330
    %v349 = vunpack.c.l.b16 %v310
    %v350 = vunpack.c.l.b16 %v311
    %v351 = vunpack.c.l.b16 %v312
    %v352 = vunpack.c.l.b16 %v313
    %v353 = vunpack.c.l.b16 %v314
    %v354 = vunpack.c.l.b16 %v315
    %v355 = vunpack.c.l.b16 %v316
    %v356 = vunpack.c.l.b16 %v317
    %v357 = vunpack.c.l.b16 %v318
    %v358 = vunpack.c.l.b16 %v319
    %v359 = vunpack.c.l.b16 %v320
    %v360 = vunpack.c.l.b16 %v321
    %v361 = vunpack.c.l.b16 %v322
    %v362 = vunpack.c.l.b16 %v323
    %v363 = vunpack.c.l.b16 %v324
    %v364 = vunpack.c.l.b16 %v325
    %v365 = vpack.c.b16 %v350, %v349
    %v366 = vpack.c.b16 %v352, %v351
    %v367 = vpack.c.b16 %v354, %v353
    %v368 = vpack.c.b16 %v356, %v355
    %v369 = vpack.c.b16 %v358, %v357
    %v370 = vpack.c.b16 %v360, %v359
    %v371 = vpack.c.b16 %v362, %v361
    %v372 = vpack.c.b16 %v364, %v363
    %381 = vmatprep.subr.bf16.mxu0 0
    %382 = vmatpush1.bf16.msra.mxu0 %v365
    %383 = vmatprep.subr.bf16.mxu0 0
    %384 = vmatpush1.bf16.msra.mxu0 %v366
    %385 = vmatprep.subr.bf16.mxu0 0
    %386 = vmatpush1.bf16.msra.mxu0 %v367
    %387 = vmatprep.subr.bf16.mxu0 0
    %388 = vmatpush1.bf16.msra.mxu0 %v368
    %389 = vmatprep.subr.bf16.mxu0 0
    %390 = vmatpush1.bf16.msra.mxu0 %v369
    %391 = vmatprep.subr.bf16.mxu0 0
    %392 = vmatpush1.bf16.msra.mxu0 %v370
    %393 = vmatprep.subr.bf16.mxu0 0
    %394 = vmatpush1.bf16.msra.mxu0 %v371
    %395 = vmatprep.subr.bf16.mxu0 0
    %396 = vmatpush1.bf16.msra.mxu0 %v372
    %397 = vmatprep.subr.bf16.mxu0 0
    %398 = vmatpush1.bf16.msra.mxu0 0
    %399 = vmatprep.subr.bf16.mxu0 0
    %400 = vmatpush1.bf16.msra.mxu0 0
    %401 = vmatprep.subr.bf16.mxu0 0
    %402 = vmatpush1.bf16.msra.mxu0 0
    %403 = vmatprep.subr.bf16.mxu0 0
    %404 = vmatpush1.bf16.msra.mxu0 0
    %405 = vmatprep.subr.bf16.mxu0 0
    %406 = vmatpush1.bf16.msra.mxu0 0
    %407 = vmatprep.subr.bf16.mxu0 0
    %408 = vmatpush1.bf16.msra.mxu0 0
    %409 = vmatprep.subr.bf16.mxu0 0
    %410 = vmatpush1.bf16.msra.mxu0 0
    %411 = vmatprep.subr.bf16.mxu0 0
    %412 = vmatpush1.bf16.msra.mxu0 0
    %413 = vmatprep.mubr.bf16.mxu0 0
    %414 = vmatmul.mubr.bf16.gmra.mrb[0].mxu0 %v309
    %v415 = vpop.f32.mrb[0].mxu0
    %v416 = vadd.f32 %v331, %v415
    %v417 = vpop.f32.mrb[0].mxu0
    %v418 = vpop.f32.mrb[0].mxu0
    %v419 = vpop.f32.mrb[0].mxu0
    %420 = vdwg.mxu0
    %v421 = vtanh.pop %v416
    %422 = vst [vmem:[#allocation10] sm:$0xff] %v421
    // Predicated region
    $region46: #{tpu_custom_call.1} parent=1 // pred_check
      _
    $region47: #{tpu_custom_call.1} parent=1 // pred_check_branch
      %424 = sbr.rel (0) target = $region49
    $region48: #{tpu_custom_call.1} parent=1 // pred_region
      %s426 = ssub.s32 128, 128
      %427 = vsyncadd [#allocation4], %s426
      %s429 = sshll.u32 [#allocation10], 4
      %s430 = int_to_ptr.vmem [resolvable:$true] %s429
      %432 = dma.vmem_to_hbm [thread:$0]  %s430, 128, %s7, [#allocation4]
    $region49: #{tpu_custom_call.1} parent=1 // pred_fallthru
      _
    // Predicated region
    $region50: #{tpu_custom_call.1} parent=1 // pred_check
      _
    $region51: #{tpu_custom_call.1} parent=1 // pred_check_branch
      %434 = sbr.rel (0) target = $region53
    $region52: #{tpu_custom_call.1} parent=1 // pred_region
      %435 = dma.done [#allocation4], 128
    $region53: #{tpu_custom_call.1} parent=1 // pred_fallthru
      _
    %436 = vsyncpa [#allocation3], 1
    %437 = vsyncpa [#allocation6], 1
    %438 = vsyncpa [#allocation9], 1
    %439 = vsyncpa [#allocation4], 1

</llo_original>
